<compile_context>
chip_gen: v5e
topology: v5e:2x2
jax: 0.10.0
libtpu: 0.0.40
codegen_flags: <defaults>
</compile_context>

<pallas_src>
import functools

import jax
import jax.numpy as jnp
from jax import lax
from jax.experimental import pallas as pl
from jax.experimental.pallas import tpu as pltpu

NEG_SLOPE = 0.2      # GATConv default negative_slope
BIG_NEG = -1e9       # mask value for softmax over non-edges

# Model hyper-parameters implied by the module
HEADS = 16
O1 = 50              # gconv1 out channels per head
O2 = 40              # gconv2 out channels per head
D3 = 40              # GraphConv out
D4 = 40              # SAGEConv out
FC1 = 32
OUTPUT_DIM = 4       # len(CLASSES); synthetic choice
LANE_PAD = 128       # lane-dense width for the narrow conv outputs


# ---------------------------------------------------------------------------
# generation / N aware VMEM budgeting
# ---------------------------------------------------------------------------
def _vmem_limit_bytes():
    cap = 64 * 1024 * 1024                      # conservative fallback (v7x physical)
    try:
        cap = int(pltpu.get_tpu_info().vmem_capacity_bytes)
    except Exception:
        pass
    # ~51 MiB on v7x (64 MiB), ~102 MiB on v5e/v6e (128 MiB), capped at 110 MiB.
    return int(min(cap * 0.8, 110 * 1024 * 1024))


def _pick_tm(n, hw_max, heads, vmem_limit):
    """Largest row-tile (multiple of 16, divides n) that fits the VMEM budget of
    the GAT attention kernel (the biggest consumer)."""
    o_pad = 128                                  # per-head lanes pad to 128 in VMEM
    invariant = 2 * (heads * n * o_pad * 4       # resident head-major xw (dbl-buf)
                     + heads * n * 4             # a_src^T
                     + heads * o_pad * 4)        # head-major bias
    avail = vmem_limit - invariant - (4 << 20)   # slack for compiler scratch
    per_row = (2 * n * 2                         # adj tile (bf16, dbl-buf)
               + 2 * heads * o_pad * 4           # head-major output tile
               + 2 * heads * 4                   # a_dst tile
               + 6 * n * 4)                      # in-kernel f32 transients
    budget = 16 if avail <= per_row * 16 else avail // per_row
    cap = n if n < 32 else max(16, n // 2)       # >= 2 grid steps for v7x's 2 TCs
    budget = int(min(budget, cap, 1024))
    best = None
    d = 16                                       # bf16 adj => tm % 16 == 0 (or tm == n)
    while d <= min(budget, n):
        if n % d == 0:
            best = d
        d += 16
    return best if best is not None else n


def _cparams(vmem_limit, parallel=True):
    sem = ("parallel",) if parallel else None
    return pltpu.CompilerParams(dimension_semantics=sem,
                                vmem_limit_bytes=vmem_limit)


# ---------------------------------------------------------------------------
# kernels
# ---------------------------------------------------------------------------
def _gat_pre_kernel(x_ref, w_ref, asrc_ref, adst_ref, xw_ref, as_ref, ad_ref):
    """Shared GAT linear + per-head attention scores for one node-row tile."""
    f32 = jnp.float32
    xw = jnp.dot(x_ref[...], w_ref[...], preferred_element_type=f32)        # [TM, H*O]
    xw_ref[...] = xw
    as_ref[...] = jnp.dot(xw, asrc_ref[...], preferred_element_type=f32)    # [TM, H]
    ad_ref[...] = jnp.dot(xw, adst_ref[...], preferred_element_type=f32)    # [TM, H]


def _gat_attn_kernel(adj_ref, xw_ref, asrct_ref, adst_ref, b_ref, o_ref):
    """Per-head softmax attention over incoming edges (+ self loop) for one tile
    of target rows.  xw / bias / output are head-major, so per-head access is a
    free leading-axis index (no lane slices, no concat)."""
    f32 = jnp.float32
    tm, n = adj_ref.shape
    heads = xw_ref.shape[0]

    # self loops derived in-kernel: column j == global target row index
    row0 = pl.program_id(0) * tm
    col_ids = lax.broadcasted_iota(jnp.int32, (tm, n), 1)
    row_ids = lax.broadcasted_iota(jnp.int32, (tm, n), 0) + row0
    edge_mask = jnp.logical_or(adj_ref[...] > 0, col_ids == row_ids)

    a_dst = adst_ref[...]                                        # [TM, H]

    # static unroll over heads; each head only touches leading-axis indexed data.
    for h in range(heads):
        logits = a_dst[:, h:h + 1] + asrct_ref[h:h + 1, :]       # [TM, N]
        leaky = jnp.where(logits > 0.0, logits, NEG_SLOPE * logits)
        masked = jnp.where(edge_mask, leaky, BIG_NEG)
        m = jnp.max(masked, axis=1, keepdims=True)
        p = jnp.exp(masked - m)
        s = jnp.sum(p, axis=1, keepdims=True)
        attn = p * pl.reciprocal(s, approx=True)                 # row softmax (EUP)
        out_h = jnp.dot(attn, xw_ref[h], preferred_element_type=f32)   # [TM, O]
        o_ref[h] = jnp.maximum(out_h + b_ref[h], 0.0)            # bias + ReLU


def _neighbor_conv_kernel(adj_ref, xfull_ref, wnbr_ref, wroot_ref, b_ref, o_ref,
                          *, mean):
    """GraphConv (mean=False) / SAGEConv (mean=True) + ReLU for one row tile."""
    f32 = jnp.float32
    tm = adj_ref.shape[0]
    adj = adj_ref[...].astype(f32)                               # bf16->f32 (exact 0/1)
    agg = jnp.dot(adj, xfull_ref[...], preferred_element_type=f32)    # [TM, Fin]
    if mean:
        deg = jnp.sum(adj, axis=1, keepdims=True)
        agg = agg * pl.reciprocal(jnp.maximum(deg, 1.0), approx=True)
    # this tile's own rows are already resident inside xfull -> no extra operand/DMA.
    row0 = pl.multiple_of(pl.program_id(0) * tm, tm)
    x_tile = xfull_ref[pl.ds(row0, tm), :]
    out = (jnp.dot(agg, wnbr_ref[...], preferred_element_type=f32) + b_ref[...]
           + jnp.dot(x_tile, wroot_ref[...], preferred_element_type=f32))
    o_ref[...] = jnp.maximum(out, 0.0)


def _pool_fc_kernel(pool_ref, x_ref, wfc1_ref, bfc1_ref, wfc3_ref, bfc3_ref, o_ref):
    """global_mean_pool -> fc1 -> ReLU -> (dropout = identity) -> fc3."""
    f32 = jnp.float32
    pooled = jnp.dot(pool_ref[...], x_ref[...], preferred_element_type=f32)  # [G, 128]
    h1 = jnp.maximum(jnp.dot(pooled, wfc1_ref[...], preferred_element_type=f32)
                     + bfc1_ref[...], 0.0)
    # TODO(synk): dropout is identity at inference; fc2 is unused in forward().
    o_ref[...] = (jnp.dot(h1, wfc3_ref[...], preferred_element_type=f32)
                  + bfc3_ref[...])


# ---------------------------------------------------------------------------
# pallas_call wrappers
# ---------------------------------------------------------------------------
def _gat_layer_pallas(x, adj_bf, w, b, asrc, adst, tm, vmem_limit):
    n, fin = x.shape
    hw = w.shape[1]
    heads = asrc.shape[1]
    o = hw // heads
    grid = (n // tm,)

    xw, a_src, a_dst = pl.pallas_call(
        _gat_pre_kernel,
        grid=grid,
        in_specs=[
            pl.BlockSpec((tm, fin), lambda i: (i, 0)),
            pl.BlockSpec((fin, hw), lambda i: (0, 0)),
            pl.BlockSpec((hw, heads), lambda i: (0, 0)),
            pl.BlockSpec((hw, heads), lambda i: (0, 0)),
        ],
        out_specs=(
            pl.BlockSpec((tm, hw), lambda i: (i, 0)),
            pl.BlockSpec((tm, heads), lambda i: (i, 0)),
            pl.BlockSpec((tm, heads), lambda i: (i, 0)),
        ),
        out_shape=(
            jax.ShapeDtypeStruct((n, hw), jnp.float32),
            jax.ShapeDtypeStruct((n, heads), jnp.float32),
            jax.ShapeDtypeStruct((n, heads), jnp.float32),
        ),
        compiler_params=_cparams(vmem_limit),
    )(x, w, asrc, adst)

    # cheap XLA-side layout plumbing, once per layer:
    xw_hm = xw.reshape(n, heads, o).transpose(1, 0, 2)     # [H, N, O] head-major
    a_src_t = a_src.T                                      # [H, N]
    b_hm = b.reshape(heads, 1, o)                          # [H, 1, O]

    out_hm = pl.pallas_call(
        _gat_attn_kernel,
        grid=grid,
        in_specs=[
            pl.BlockSpec((tm, n), lambda i: (i, 0)),           # adj rows (bf16)
            pl.BlockSpec((heads, n, o), lambda i: (0, 0, 0)),  # xw head-major
            pl.BlockSpec((heads, n), lambda i: (0, 0)),        # a_src^T
            pl.BlockSpec((tm, heads), lambda i: (i, 0)),       # a_dst for this tile
            pl.BlockSpec((heads, 1, o), lambda i: (0, 0, 0)),  # bias head-major
        ],
        out_specs=pl.BlockSpec((heads, tm, o), lambda i: (0, i, 0)),
        out_shape=jax.ShapeDtypeStruct((heads, n, o), jnp.float32),
        compiler_params=_cparams(vmem_limit),
    )(adj_bf, xw_hm, a_src_t, a_dst, b_hm)

    # back to concat-over-heads layout for the next stage (XLA transpose).
    return out_hm.transpose(1, 0, 2).reshape(n, hw)


def _neighbor_conv_pallas(x, adj_bf, w_nbr, w_root, b, mean, tm, vmem_limit):
    n, fin = x.shape
    fout = w_nbr.shape[1]
    grid = (n // tm,)
    kernel = functools.partial(_neighbor_conv_kernel, mean=mean)
    return pl.pallas_call(
        kernel,
        grid=grid,
        in_specs=[
            pl.BlockSpec((tm, n), lambda i: (i, 0)),        # adj rows (bf16)
            pl.BlockSpec((n, fin), lambda i: (0, 0)),       # x, all source nodes
            pl.BlockSpec((fin, fout), lambda i: (0, 0)),
            pl.BlockSpec((fin, fout), lambda i: (0, 0)),
            pl.BlockSpec((1, fout), lambda i: (0, 0)),
        ],
        out_specs=pl.BlockSpec((tm, fout), lambda i: (i, 0)),
        out_shape=jax.ShapeDtypeStruct((n, fout), jnp.float32),
        compiler_params=_cparams(vmem_limit),
    )(adj_bf, x, w_nbr, w_root, b)


def _pool_fc_pallas(pool, x4, wfc1, bfc1, wfc3, bfc3, vmem_limit):
    g = pool.shape[0]
    return pl.pallas_call(
        _pool_fc_kernel,
        out_shape=jax.ShapeDtypeStruct((g, OUTPUT_DIM), jnp.float32),
        compiler_params=_cparams(vmem_limit, parallel=False),
    )(pool, x4, wfc1, bfc1, wfc3, bfc3)


def gnn_pallas(x, adj, pool, params, tm=None):
    n = x.shape[0]
    hw_max = max(params["w1"].shape[1], params["w2"].shape[1])
    vmem_limit = _vmem_limit_bytes()
    if tm is None:
        tm = _pick_tm(n, hw_max, HEADS, vmem_limit)
    assert n % tm == 0, (n, tm)

    adj_bf = adj.astype(jnp.bfloat16)          # exact for 0/1 edge weights

    x1 = _gat_layer_pallas(x, adj_bf, params["w1"], params["b1"],
                           params["asrc1"], params["adst1"], tm, vmem_limit)
    x2 = _gat_layer_pallas(x1, adj_bf, params["w2"], params["b2"],
                           params["asrc2"], params["adst2"], tm, vmem_limit)

    # zero-pad the narrow (40-wide) conv weights/biases to 128 lanes: lane-dense
    # stores, identical math (padded rows/cols are zero, ReLU(0)=0).
    pad = LANE_PAD
    w3rel = jnp.pad(params["w3rel"], ((0, 0), (0, pad - D3)))
    w3root = jnp.pad(params["w3root"], ((0, 0), (0, pad - D3)))
    b3 = jnp.pad(params["b3"], ((0, 0), (0, pad - D3)))
    w4l = jnp.pad(params["w4l"], ((0, pad - D3), (0, pad - D4)))
    w4r = jnp.pad(params["w4r"], ((0, pad - D3), (0, pad - D4)))
    b4 = jnp.pad(params["b4"], ((0, 0), (0, pad - D4)))
    wfc1 = jnp.pad(params["wfc1"], ((0, pad - D4), (0, 0)))

    x3 = _neighbor_conv_pallas(x2, adj_bf, w3rel, w3root, b3, mean=False,
                               tm=tm, vmem_limit=vmem_limit)          # [N, 128]
    x4 = _neighbor_conv_pallas(x3, adj_bf, w4l, w4r, b4, mean=True,
                               tm=tm, vmem_limit=vmem_limit)          # [N, 128]
    return _pool_fc_pallas(pool, x4, wfc1, params["bfc1"],
                           params["wfc3"], params["bfc3"], vmem_limit)


# ---------------------------------------------------------------------------
# pure-JAX reference (same dense math, exact divides, unpadded)
# ---------------------------------------------------------------------------
def gnn_reference(x, adj, pool, params):
    n = x.shape[0]
    adj_sl = jnp.maximum(adj, jnp.eye(n, dtype=adj.dtype))

    def gat(xin, w, b, asrc, adst):
        heads = asrc.shape[1]
        o = w.shape[1] // heads
        xw = xin @ w
        a_src = xw @ asrc
        a_dst = xw @ adst
        outs = []
        for h in range(heads):
            logits = a_dst[:, h:h + 1] + a_src[:, h][None, :]
            leaky = jnp.where(logits > 0.0, logits, NEG_SLOPE * logits)
            masked = jnp.where(adj_sl > 0, leaky, BIG_NEG)
            attn = jax.nn.softmax(masked, axis=1)
            outs.append(attn @ xw[:, h * o:(h + 1) * o])
        return jnp.maximum(jnp.concatenate(outs, axis=1) + b, 0.0)

    x1 = gat(x, params["w1"], params["b1"], params["asrc1"], params["adst1"])
    x2 = gat(x1, params["w2"], params["b2"], params["asrc2"], params["adst2"])
    x3 = jnp.maximum((adj @ x2) @ params["w3rel"] + params["b3"]
                     + x2 @ params["w3root"], 0.0)
    deg = jnp.sum(adj, axis=1, keepdims=True)
    mean_agg = (adj @ x3) / jnp.maximum(deg, 1.0)
    x4 = jnp.maximum(mean_agg @ params["w4l"] + params["b4"]
                     + x3 @ params["w4r"], 0.0)
    pooled = pool @ x4
    h1 = jnp.maximum(pooled @ params["wfc1"] + params["bfc1"], 0.0)
    return h1 @ params["wfc3"] + params["bfc3"]


# ---------------------------------------------------------------------------
# parameters / graph builders
# ---------------------------------------------------------------------------
def _block_att(att, heads, o):
    """att [heads, o] -> block matrix A [heads*o, heads], A[h*o+d, h] = att[h, d]."""
    rows = jnp.arange(heads * o)
    cols = rows // o
    a = jnp.zeros((heads * o, heads), jnp.float32)
    return a.at[rows, cols].set(att.reshape(-1))


def make_params(key, input_dim):
    ks = iter(jax.random.split(key, 32))
    s = 0.1

    def lin(kin, kout):
        return jax.random.normal(next(ks), (kin, kout), jnp.float32) * s

    p = {}
    # GATConv 1
    p["w1"] = lin(input_dim, HEADS * O1)
    p["b1"] = jax.random.normal(next(ks), (1, HEADS * O1), jnp.float32) * s
    att_s1 = jax.random.normal(next(ks), (HEADS, O1), jnp.float32) * s
    att_d1 = jax.random.normal(next(ks), (HEADS, O1), jnp.float32) * s
    p["asrc1"], p["adst1"] = _block_att(att_s1, HEADS, O1), _block_att(att_d1, HEADS, O1)
    # GATConv 2
    p["w2"] = lin(HEADS * O1, HEADS * O2)
    p["b2"] = jax.random.normal(next(ks), (1, HEADS * O2), jnp.float32) * s
    att_s2 = jax.random.normal(next(ks), (HEADS, O2), jnp.float32) * s
    att_d2 = jax.random.normal(next(ks), (HEADS, O2), jnp.float32) * s
    p["asrc2"], p["adst2"] = _block_att(att_s2, HEADS, O2), _block_att(att_d2, HEADS, O2)
    # GraphConv
    p["w3rel"] = lin(HEADS * O2, D3)
    p["w3root"] = lin(HEADS * O2, D3)
    p["b3"] = jax.random.normal(next(ks), (1, D3), jnp.float32) * s
    # SAGEConv
    p["w4l"] = lin(D3, D4)
    p["w4r"] = lin(D3, D4)
    p["b4"] = jax.random.normal(next(ks), (1, D4), jnp.float32) * s
    # fc1, fc3 (fc2 is unused in forward())
    p["wfc1"] = lin(D4, FC1)
    p["bfc1"] = jax.random.normal(next(ks), (1, FC1), jnp.float32) * s
    p["wfc3"] = lin(FC1, OUTPUT_DIM)
    p["bfc3"] = jax.random.normal(next(ks), (1, OUTPUT_DIM), jnp.float32) * s
    return p


def build_graph(num_graphs, nodes_per_graph):
    """Undirected rings -> dense adjacency (row=target, col=source) + mean-pool."""
    src, dst = [], []
    for g in range(num_graphs):
        base = g * nodes_per_graph
        for i in range(nodes_per_graph):
            j = (i + 1) % nodes_per_graph
            src += [base + i, base + j]
            dst += [base + j, base + i]
    n = num_graphs * nodes_per_graph
    src = jnp.array(src, jnp.int32)
    dst = jnp.array(dst, jnp.int32)
    batch = jnp.repeat(jnp.arange(num_graphs, dtype=jnp.int32), nodes_per_graph)
    adj = jnp.zeros((n, n), jnp.float32).at[dst, src].set(1.0)
    onehot = (batch[None, :] == jnp.arange(num_graphs)[:, None]).astype(jnp.float32)
    pool = onehot / jnp.maximum(onehot.sum(axis=1, keepdims=True), 1.0)
    return adj, pool


if __name__ == "__main__":
    key = jax.random.PRNGKey(0)
    num_graphs, nodes_per_graph, input_dim = 2, 16, 8
    n_nodes = num_graphs * nodes_per_graph          # 32 -> auto tm=16, 2-step grid

    adj, pool = build_graph(num_graphs, nodes_per_graph)
    k_x, k_p = jax.random.split(key)
    x = jax.random.normal(k_x, (n_nodes, input_dim), jnp.float32)
    params = make_params(k_p, input_dim)

    out = jax.block_until_ready(gnn_pallas(x, adj, pool, params))
    ref = jax.block_until_ready(gnn_reference(x, adj, pool, params))

    assert out.shape == (num_graphs, OUTPUT_DIM)
    assert bool(jnp.all(jnp.isfinite(out)))
    assert bool(jnp.allclose(out, ref, rtol=5e-3, atol=5e-3)), (out, ref)
    print("KERNEL_OK")
</pallas_src>

<mosaic_0001>
module attributes {stable_mosaic.version = 11 : i64} {
  func.func @_gat_pre_kernel(%arg0: i32, %arg1: memref<16x8xf32, #tpu.memory_space<vmem>>, %arg2: memref<8x800xf32, #tpu.memory_space<vmem>>, %arg3: memref<800x16xf32, #tpu.memory_space<vmem>>, %arg4: memref<800x16xf32, #tpu.memory_space<vmem>>, %arg5: memref<16x800xf32, #tpu.memory_space<vmem>>, %arg6: memref<16x16xf32, #tpu.memory_space<vmem>>, %arg7: memref<16x16xf32, #tpu.memory_space<vmem>>) attributes {dimension_semantics = [#tpu.dimension_semantics<parallel>], iteration_bounds = array<i64: 2>, scalar_prefetch = 0 : i64, scratch_operands = 0 : i64, tpu.core_type = #tpu.core_type<tc>, window_params = [{transform_indices = @transform_0, window_bounds = array<i64: 16, 8>}, {pipeline_mode = #tpu.pipeline_mode<synchronous>, transform_indices = @transform_1, window_bounds = array<i64: 8, 800>}, {pipeline_mode = #tpu.pipeline_mode<synchronous>, transform_indices = @transform_2, window_bounds = array<i64: 800, 16>}, {pipeline_mode = #tpu.pipeline_mode<synchronous>, transform_indices = @transform_3, window_bounds = array<i64: 800, 16>}, {transform_indices = @transform_4, window_bounds = array<i64: 16, 800>}, {transform_indices = @transform_5, window_bounds = array<i64: 16, 16>}, {transform_indices = @transform_6, window_bounds = array<i64: 16, 16>}]} {
    %c0 = arith.constant 0 : index
    %c0_0 = arith.constant 0 : index
    %0 = vector.load %arg1[%c0, %c0_0] : memref<16x8xf32, #tpu.memory_space<vmem>>, vector<16x8xf32>
    %c0_1 = arith.constant 0 : index
    %c0_2 = arith.constant 0 : index
    %1 = vector.load %arg2[%c0_1, %c0_2] : memref<8x800xf32, #tpu.memory_space<vmem>>, vector<8x800xf32>
    %cst = arith.constant dense<0.000000e+00> : vector<16x800xf32>
    %2 = tpu.matmul %0, %1, %cst {dimension_numbers = #tpu.dot_dimension_numbers<[1], [0], [0], [1], [0, 0, 1, 1], [], []>} : vector<16x8xf32>, vector<8x800xf32>, vector<16x800xf32> -> vector<16x800xf32>
    %c0_3 = arith.constant 0 : index
    %c0_4 = arith.constant 0 : index
    %3 = vector.load %arg5[%c0_3, %c0_4] : memref<16x800xf32, #tpu.memory_space<vmem>>, vector<16x800xf32>
    tpu.vector_store %arg5[%c0_3, %c0_4], %2 {strides = array<i32>} : memref<16x800xf32, #tpu.memory_space<vmem>>, vector<16x800xf32>,
    %c0_5 = arith.constant 0 : index
    %c0_6 = arith.constant 0 : index
    %4 = vector.load %arg3[%c0_5, %c0_6] : memref<800x16xf32, #tpu.memory_space<vmem>>, vector<800x16xf32>
    %cst_7 = arith.constant dense<0.000000e+00> : vector<16x16xf32>
    %5 = tpu.matmul %2, %4, %cst_7 {dimension_numbers = #tpu.dot_dimension_numbers<[1], [0], [0], [1], [0, 0, 1, 1], [], []>} : vector<16x800xf32>, vector<800x16xf32>, vector<16x16xf32> -> vector<16x16xf32>
    %c0_8 = arith.constant 0 : index
    %c0_9 = arith.constant 0 : index
    %6 = vector.load %arg6[%c0_8, %c0_9] : memref<16x16xf32, #tpu.memory_space<vmem>>, vector<16x16xf32>
    tpu.vector_store %arg6[%c0_8, %c0_9], %5 {strides = array<i32>} : memref<16x16xf32, #tpu.memory_space<vmem>>, vector<16x16xf32>,
    %c0_10 = arith.constant 0 : index
    %c0_11 = arith.constant 0 : index
    %7 = vector.load %arg4[%c0_10, %c0_11] : memref<800x16xf32, #tpu.memory_space<vmem>>, vector<800x16xf32>
    %cst_12 = arith.constant dense<0.000000e+00> : vector<16x16xf32>
    %8 = tpu.matmul %2, %7, %cst_12 {dimension_numbers = #tpu.dot_dimension_numbers<[1], [0], [0], [1], [0, 0, 1, 1], [], []>} : vector<16x800xf32>, vector<800x16xf32>, vector<16x16xf32> -> vector<16x16xf32>
    %c0_13 = arith.constant 0 : index
    %c0_14 = arith.constant 0 : index
    %9 = vector.load %arg7[%c0_13, %c0_14] : memref<16x16xf32, #tpu.memory_space<vmem>>, vector<16x16xf32>
    tpu.vector_store %arg7[%c0_13, %c0_14], %8 {strides = array<i32>} : memref<16x16xf32, #tpu.memory_space<vmem>>, vector<16x16xf32>,
    return
  }
  func.func @transform_0(%arg0: i32) -> (i32, i32) {
    %c0_i32 = arith.constant 0 : i32
    %c0_i32_0 = arith.constant 0 : i32
    return %arg0, %c0_i32 : i32, i32
  }
  func.func @transform_1(%arg0: i32) -> (i32, i32) {
    %c0_i32 = arith.constant 0 : i32
    %c0_i32_0 = arith.constant 0 : i32
    %c0_i32_1 = arith.constant 0 : i32
    return %c0_i32, %c0_i32_0 : i32, i32
  }
  func.func @transform_2(%arg0: i32) -> (i32, i32) {
    %c0_i32 = arith.constant 0 : i32
    %c0_i32_0 = arith.constant 0 : i32
    %c0_i32_1 = arith.constant 0 : i32
    return %c0_i32, %c0_i32_0 : i32, i32
  }
  func.func @transform_3(%arg0: i32) -> (i32, i32) {
    %c0_i32 = arith.constant 0 : i32
    %c0_i32_0 = arith.constant 0 : i32
    %c0_i32_1 = arith.constant 0 : i32
    return %c0_i32, %c0_i32_0 : i32, i32
  }
  func.func @transform_4(%arg0: i32) -> (i32, i32) {
    %c0_i32 = arith.constant 0 : i32
    %c0_i32_0 = arith.constant 0 : i32
    return %arg0, %c0_i32 : i32, i32
  }
  func.func @transform_5(%arg0: i32) -> (i32, i32) {
    %c0_i32 = arith.constant 0 : i32
    %c0_i32_0 = arith.constant 0 : i32
    return %arg0, %c0_i32 : i32, i32
  }
  func.func @transform_6(%arg0: i32) -> (i32, i32) {
    %c0_i32 = arith.constant 0 : i32
    %c0_i32_0 = arith.constant 0 : i32
    return %arg0, %c0_i32 : i32, i32
  }
}

</mosaic_0001>

<llo_original>
// kernel: tpu_custom_call.1
$region0: #{tpu_custom_call.1}
  #allocation0 [shape = 'u32[]', space=smem, size = 0x4, offset = 0x4, fixed_abs, tag = 'smem constant byte address 0x4 - core index']
  #allocation1 [shape = 'u32[72,128]{1,0:T(1,128)}', space=vmem, size = 0x9000, scoped, tag = 'internal scratch']
  %s0 = inlined_call_operand.vmem [shape: f32[32,8], index: 0, kind: input, shape index: {}]
  %s1 = inlined_call_operand.vmem [shape: f32[8,800], index: 1, kind: input, shape index: {}]
  %s2 = inlined_call_operand.vmem [shape: f32[800,16], index: 2, kind: input, shape index: {}]
  %s3 = inlined_call_operand.vmem [shape: f32[800,16], index: 3, kind: input, shape index: {}]
  %s4 = inlined_call_operand.hbm [shape: f32[32,800], index: 4, kind: output, shape index: {0}]
  %s5 = inlined_call_operand.vmem [shape: f32[32,16], index: 5, kind: output, shape index: {1}]
  %s6 = inlined_call_operand.vmem [shape: f32[32,16], index: 6, kind: output, shape index: {2}]
  %7 = xla_tuple %s4, %s5, %s6
  %s8 = sld [smem:[#allocation0]]
  $region65: #{tpu_custom_call.1} parent=0
    _
  %s10 = ssub.s32 1, %s8
  %s11 = scalar_select 0, %s10, %s8
  $region1: #{tpu_custom_call.1} parent=0
    #allocation2 [shape = 'u8[114688]{0}', space=vmem, size = 0x1c000, scoped, tag = 'output window, operand 0']
    #allocation3 [shape = 's32[2]{0}', space=sflag, size = 0x8, scoped, tag = 'scoped memory for tpu_custom_call.1']
    %12 = vsyncpa [#allocation3], 0
    %s13 = scalar_lea.sflag [#allocation3], 1
    %14 = vsyncpa %s13, 0
    loop: start=0, step=1, limit=4
    $region2: #{tpu_custom_call.1} parent=1 // loop_pre_header
      _
    $region3: #{tpu_custom_call.1} parent=1 // loop_header
      %s16 = sphi 0, %s20
      %p17 = scmp.ge.s32.totalorder %s16, 4
      %s26 = sphi 0, %s28
      %s29 = sphi 0, %s26
      %s30 = sphi 0, %s29
      %s46 = sphi 0, %s30
      %s50 = sphi 0, %s50
      %s52 = sphi 0, %s50
      %s53 = sphi 0, %s52
      %s67 = sphi 0, %s53
      %s71 = sphi 0, %s71
      %s73 = sphi 0, %s71
      %s74 = sphi 0, %s73
      %s88 = sphi 0, %s74
      %s92 = sphi 0, %s92
      %s94 = sphi 0, %s92
      %s95 = sphi 0, %s94
      %s109 = sphi 0, %s95
      %s115 = sphi 0, %s117
      %s118 = sphi 0, %s115
      %s119 = sphi 0, %s118
      %s135 = sphi 0, %s119
      %s141 = sphi 0, %s143
      %s144 = sphi 0, %s141
      %s145 = sphi 0, %s144
      %s161 = sphi 0, %s145
      %s167 = sphi 0, %s169
      %s170 = sphi 0, %s167
      %s171 = sphi 0, %s170
      %s187 = sphi 0, %s171
    $region4: #{tpu_custom_call.1} parent=1 // loop_header_branch
      %19 = sbr.rel (%p17) target = $region8
    $region5: #{tpu_custom_call.1} parent=1 // loop_body
      %s21 = ssub.s32 %s16, 1
      %s22 = ssub.s32 %s16, 2
      %s23 = sadd.s32 %s16, 1
      %s24 = ssub.s32 %s16, %s23
      %p25 = scmp.eq.s32.totalorder %s24, 0
      %s27 = sadd.s32 %s26, 1
      %s28 = scalar_select %p25, %s26, %s27
      %p31 = pneg %p25
      %p32 = scmp.eq.s32.totalorder %s16, 1
      %p33 = por %p31, %p32
      %p34 = scmp.ne.s32.totalorder %s26, %s29
      %p35 = scmp.eq.s32.totalorder %s16, 0
      %p36 = por %p34, %p35
      %p37 = scmp.ne.s32.totalorder %s26, %s29
      %p38 = scmp.eq.s32.totalorder %s21, 1
      %p39 = por %p37, %p38
      %p40 = scmp.ne.s32.totalorder %s29, %s30
      %p41 = scmp.eq.s32.totalorder %s21, 0
      %p42 = por %p40, %p41
      %p43 = scmp.ne.s32.totalorder %s29, %s30
      %p44 = scmp.eq.s32.totalorder %s22, 1
      %p45 = por %p43, %p44
      %p47 = scmp.ne.s32.totalorder %s30, %s46
      %p48 = scmp.eq.s32.totalorder %s22, 0
      %p49 = por %p47, %p48
      %s51 = sadd.s32 %s50, 1
      %p54 = scmp.eq.s32.totalorder %s16, 1
      %p55 = scmp.ne.s32.totalorder %s50, %s52
      %p56 = scmp.eq.s32.totalorder %s16, 0
      %p57 = por %p55, %p56
      %p58 = scmp.ne.s32.totalorder %s50, %s52
      %p59 = scmp.eq.s32.totalorder %s21, 1
      %p60 = por %p58, %p59
      %p61 = scmp.ne.s32.totalorder %s52, %s53
      %p62 = scmp.eq.s32.totalorder %s21, 0
      %p63 = por %p61, %p62
      %p64 = scmp.ne.s32.totalorder %s52, %s53
      %p65 = scmp.eq.s32.totalorder %s22, 1
      %p66 = por %p64, %p65
      %p68 = scmp.ne.s32.totalorder %s53, %s67
      %p69 = scmp.eq.s32.totalorder %s22, 0
      %p70 = por %p68, %p69
      %s72 = sadd.s32 %s71, 1
      %p75 = scmp.eq.s32.totalorder %s16, 1
      %p76 = scmp.ne.s32.totalorder %s71, %s73
      %p77 = scmp.eq.s32.totalorder %s16, 0
      %p78 = por %p76, %p77
      %p79 = scmp.ne.s32.totalorder %s71, %s73
      %p80 = scmp.eq.s32.totalorder %s21, 1
      %p81 = por %p79, %p80
      %p82 = scmp.ne.s32.totalorder %s73, %s74
      %p83 = scmp.eq.s32.totalorder %s21, 0
      %p84 = por %p82, %p83
      %p85 = scmp.ne.s32.totalorder %s73, %s74
      %p86 = scmp.eq.s32.totalorder %s22, 1
      %p87 = por %p85, %p86
      %p89 = scmp.ne.s32.totalorder %s74, %s88
      %p90 = scmp.eq.s32.totalorder %s22, 0
      %p91 = por %p89, %p90
      %s93 = sadd.s32 %s92, 1
      %p96 = scmp.eq.s32.totalorder %s16, 1
      %p97 = scmp.ne.s32.totalorder %s92, %s94
      %p98 = scmp.eq.s32.totalorder %s16, 0
      %p99 = por %p97, %p98
      %p100 = scmp.ne.s32.totalorder %s92, %s94
      %p101 = scmp.eq.s32.totalorder %s21, 1
      %p102 = por %p100, %p101
      %p103 = scmp.ne.s32.totalorder %s94, %s95
      %p104 = scmp.eq.s32.totalorder %s21, 0
      %p105 = por %p103, %p104
      %p106 = scmp.ne.s32.totalorder %s94, %s95
      %p107 = scmp.eq.s32.totalorder %s22, 1
      %p108 = por %p106, %p107
      %p110 = scmp.ne.s32.totalorder %s95, %s109
      %p111 = scmp.eq.s32.totalorder %s22, 0
      %p112 = por %p110, %p111
      %s113 = ssub.s32 %s16, %s23
      %p114 = scmp.eq.s32.totalorder %s113, 0
      %s116 = sadd.s32 %s115, 1
      %s117 = scalar_select %p114, %s115, %s116
      %p120 = pneg %p114
      %p121 = scmp.eq.s32.totalorder %s16, 1
      %p122 = por %p120, %p121
      %p123 = scmp.ne.s32.totalorder %s115, %s118
      %p124 = scmp.eq.s32.totalorder %s16, 0
      %p125 = por %p123, %p124
      %p126 = scmp.ne.s32.totalorder %s115, %s118
      %p127 = scmp.eq.s32.totalorder %s21, 1
      %p128 = por %p126, %p127
      %p129 = scmp.ne.s32.totalorder %s118, %s119
      %p130 = scmp.eq.s32.totalorder %s21, 0
      %p131 = por %p129, %p130
      %p132 = scmp.ne.s32.totalorder %s118, %s119
      %p133 = scmp.eq.s32.totalorder %s22, 1
      %p134 = por %p132, %p133
      %p136 = scmp.ne.s32.totalorder %s119, %s135
      %p137 = scmp.eq.s32.totalorder %s22, 0
      %p138 = por %p136, %p137
      %s139 = ssub.s32 %s16, %s23
      %p140 = scmp.eq.s32.totalorder %s139, 0
      %s142 = sadd.s32 %s141, 1
      %s143 = scalar_select %p140, %s141, %s142
      %p146 = pneg %p140
      %p147 = scmp.eq.s32.totalorder %s16, 1
      %p148 = por %p146, %p147
      %p149 = scmp.ne.s32.totalorder %s141, %s144
      %p150 = scmp.eq.s32.totalorder %s16, 0
      %p151 = por %p149, %p150
      %p152 = scmp.ne.s32.totalorder %s141, %s144
      %p153 = scmp.eq.s32.totalorder %s21, 1
      %p154 = por %p152, %p153
      %p155 = scmp.ne.s32.totalorder %s144, %s145
      %p156 = scmp.eq.s32.totalorder %s21, 0
      %p157 = por %p155, %p156
      %p158 = scmp.ne.s32.totalorder %s144, %s145
      %p159 = scmp.eq.s32.totalorder %s22, 1
      %p160 = por %p158, %p159
      %p162 = scmp.ne.s32.totalorder %s145, %s161
      %p163 = scmp.eq.s32.totalorder %s22, 0
      %p164 = por %p162, %p163
      %s165 = ssub.s32 %s16, %s23
      %p166 = scmp.eq.s32.totalorder %s165, 0
      %s168 = sadd.s32 %s167, 1
      %s169 = scalar_select %p166, %s167, %s168
      %p172 = pneg %p166
      %p173 = scmp.eq.s32.totalorder %s16, 1
      %p174 = por %p172, %p173
      %p175 = scmp.ne.s32.totalorder %s167, %s170
      %p176 = scmp.eq.s32.totalorder %s16, 0
      %p177 = por %p175, %p176
      %p178 = scmp.ne.s32.totalorder %s167, %s170
      %p179 = scmp.eq.s32.totalorder %s21, 1
      %p180 = por %p178, %p179
      %p181 = scmp.ne.s32.totalorder %s170, %s171
      %p182 = scmp.eq.s32.totalorder %s21, 0
      %p183 = por %p181, %p182
      %p184 = scmp.ne.s32.totalorder %s170, %s171
      %p185 = scmp.eq.s32.totalorder %s22, 1
      %p186 = por %p184, %p185
      %p188 = scmp.ne.s32.totalorder %s171, %s187
      %p189 = scmp.eq.s32.totalorder %s22, 0
      %p190 = por %p188, %p189
      %p191 = scmp.le.s32.totalorder 1, %s16
      %p192 = scmp.lt.s32.totalorder %s16, 3
      %p193 = pnand %p191, %p192
      %p194 = pneg %p193
      // Predicated region
      $region9: #{tpu_custom_call.1} parent=5 // pred_check
        _
      $region10: #{tpu_custom_call.1} parent=5 // pred_check_branch
        %196 = sbr.rel (%p193) target = $region12
      $region11: #{tpu_custom_call.1} parent=5 // pred_region
        %s197 = ssub.s32 %s16, 1
        // Predicated region
        $region13: #{tpu_custom_call.1} parent=11 // pred_check
          %p198 = pneg %p63
        $region14: #{tpu_custom_call.1} parent=11 // pred_check_branch
          %200 = sbr.rel (%p198) target = $region16
        $region15: #{tpu_custom_call.1} parent=11 // pred_region
          _
        $region16: #{tpu_custom_call.1} parent=11 // pred_fallthru
          _
        // Predicated region
        $region17: #{tpu_custom_call.1} parent=11 // pred_check
          %p201 = pneg %p84
        $region18: #{tpu_custom_call.1} parent=11 // pred_check_branch
          %203 = sbr.rel (%p201) target = $region20
        $region19: #{tpu_custom_call.1} parent=11 // pred_region
          _
        $region20: #{tpu_custom_call.1} parent=11 // pred_fallthru
          _
        // Predicated region
        $region21: #{tpu_custom_call.1} parent=11 // pred_check
          %p204 = pneg %p105
        $region22: #{tpu_custom_call.1} parent=11 // pred_check_branch
          %206 = sbr.rel (%p204) target = $region24
        $region23: #{tpu_custom_call.1} parent=11 // pred_region
          _
        $region24: #{tpu_custom_call.1} parent=11 // pred_fallthru
          _
      $region12: #{tpu_custom_call.1} parent=5 // pred_fallthru
        _
      %p207 = scmp.lt.s32.totalorder %s16, 2
      // Predicated region
      $region25: #{tpu_custom_call.1} parent=5 // pred_check
        %p208 = pneg %p207
      $region26: #{tpu_custom_call.1} parent=5 // pred_check_branch
        %210 = sbr.rel (%p208) target = $region28
      $region27: #{tpu_custom_call.1} parent=5 // pred_region
        // Predicated region
        $region29: #{tpu_custom_call.1} parent=27 // pred_check
          %p211 = pneg %p36
        $region30: #{tpu_custom_call.1} parent=27 // pred_check_branch
          %213 = sbr.rel (%p211) target = $region32
        $region31: #{tpu_custom_call.1} parent=27 // pred_region
          %s214 = smul.u32 2, %s16
          %p215 = scmp.lt.s32.totalorder %s214, 3
          %s216 = scalar_select %p215, %s214, 3
          %s217 = smul.addr %s216, 8
          %s218 = scalar_lea.vmem %s0, %s217
          %s219 = smul.u32 2, %s16
        $region32: #{tpu_custom_call.1} parent=27 // pred_fallthru
          _
      $region28: #{tpu_custom_call.1} parent=5 // pred_fallthru
        _
      %p220 = scmp.le.s32.totalorder 1, %s16
      %p221 = scmp.lt.s32.totalorder %s16, 3
      %p222 = pnand %p220, %p221
      %p223 = pneg %p222
      // Predicated region
      $region33: #{tpu_custom_call.1} parent=5 // pred_check
        _
      $region34: #{tpu_custom_call.1} parent=5 // pred_check_branch
        %225 = sbr.rel (%p222) target = $region36
      $region35: #{tpu_custom_call.1} parent=5 // pred_region
        %s226 = ssub.s32 %s16, 1
        %s227 = smul.u32 2, %s21
        %p228 = scmp.lt.s32.totalorder %s227, 3
        %s229 = scalar_select %p228, %s227, 3
        %s230 = smul.addr %s229, 8
        %s231 = scalar_lea.vmem %s0, %s230
        %p232 = pneg %p42
        %p233 = pneg %p39
        %p234 = pneg %p63
        %p235 = pneg %p60
        %p236 = pneg %p84
        %p237 = pneg %p81
        %p238 = pneg %p105
        %p239 = pneg %p102
        %p240 = pneg %p131
        %p241 = pneg %p128
        %s242 = sand.u32 %s118, 1
        %s243 = scalar_lea.sflag [#allocation3], %s242
        %s244 = sand.u32 %s118, 1
        %s245 = smul.addr %s244, 112
        %s246 = scalar_lea.vmem [#allocation2], %s245
        %p247 = pneg %p157
        %p248 = pneg %p154
        %s249 = smul.u32 2, %s21
        %p250 = scmp.lt.s32.totalorder %s249, 3
        %s251 = scalar_select %p250, %s249, 3
        %s252 = smul.addr %s251, 8
        %s253 = scalar_lea.vmem %s5, %s252
        %p254 = pneg %p183
        %p255 = pneg %p180
        %s256 = smul.u32 2, %s21
        %p257 = scmp.lt.s32.totalorder %s256, 3
        %s258 = scalar_select %p257, %s256, 3
        %s259 = smul.addr %s258, 8
        %s260 = scalar_lea.vmem %s6, %s259
        %s261 = smul.u32 2, %s21
        %p262 = scmp.lt.s32.totalorder %s261, 3
        %s263 = scalar_select %p262, %s261, 3
        %s264 = smul.addr %s263, 8
        %s265 = scalar_lea.vmem %s0, %s264
        %s266 = smul.u32 2, %s21
        %s267 = smul.u32 2, %s21
        %s268 = smul.u32 2, %s21
        %p269 = scmp.lt.s32.totalorder %s268, 3
        %s270 = scalar_select %p269, %s268, 3
        %s271 = smul.addr %s270, 8
        %s272 = scalar_lea.vmem %s5, %s271
        %s273 = smul.u32 2, %s21
        %s274 = smul.u32 2, %s21
        %p275 = scmp.lt.s32.totalorder %s274, 3
        %s276 = scalar_select %p275, %s274, 3
        %s277 = smul.addr %s276, 8
        %s278 = scalar_lea.vmem %s6, %s277
        %s279 = smul.u32 2, %s21
        %v280 = vld [vmem:[%s265] sm:$0xff]
        %v281 = vld [vmem:[%s265 + $0x8] sm:$0xff]
        %v282 = vld [vmem:[%s1] sm:$0xff]
        %v283 = vld [vmem:[%s1 + $0x8] sm:$0xff]
        %v284 = vld [vmem:[%s1 + $0x10] sm:$0xff]
        %v285 = vld [vmem:[%s1 + $0x18] sm:$0xff]
        %v286 = vld [vmem:[%s1 + $0x20] sm:$0xff]
        %v287 = vld [vmem:[%s1 + $0x28] sm:$0xff]
        %v288 = vld [vmem:[%s1 + $0x30] sm:$0xff]
        %vm289 = vcmask 64512
        %v291 = vsel %vm289, %v280, 0
        %v294 = vsel %vm289, %v281, 0
        %296 = vmatpush.msra.mxu0 0.0
        %297 = vmatpush.msra.mxu0 0.0
        %298 = vmatpush.msra.mxu0 0.0
        %299 = vmatpush.msra.mxu0 0.0
        %300 = vmatpush.msra.mxu0 0.0
        %301 = vmatpush.msra.mxu0 0.0
        %302 = vmatpush.msra.mxu0 0.0
        %303 = vmatpush.msra.mxu0 0.0
        %304 = vmatpush.msra.mxu0 0.0
        %305 = vmatpush.msra.mxu0 0.0
        %306 = vmatpush.msra.mxu0 0.0
        %307 = vmatpush.msra.mxu0 0.0
        %308 = vmatpush.msra.mxu0 0.0
        %309 = vmatpush.msra.mxu0 0.0
        %310 = vmatpush.msra.mxu0 0.0
        %311 = vmatpush.msra.mxu0 %v282
        %312 = vmatmul.f32.gmra.mxu0 %v291
        %v313 = vpop.f32.mrf.mxu0
        %v314 = vadd.f32 0.0, %v313
        %315 = vmatmul.f32.gmra.mxu0 %v294
        %v316 = vpop.f32.mrf.mxu0
        %v317 = vadd.f32 0.0, %v316
        %318 = vdwg.mxu0
        %319 = vmatpush.msra.mxu0 0.0
        %320 = vmatpush.msra.mxu0 0.0
        %321 = vmatpush.msra.mxu0 0.0
        %322 = vmatpush.msra.mxu0 0.0
        %323 = vmatpush.msra.mxu0 0.0
        %324 = vmatpush.msra.mxu0 0.0
        %325 = vmatpush.msra.mxu0 0.0
        %326 = vmatpush.msra.mxu0 0.0
        %327 = vmatpush.msra.mxu0 0.0
        %328 = vmatpush.msra.mxu0 0.0
        %329 = vmatpush.msra.mxu0 0.0
        %330 = vmatpush.msra.mxu0 0.0
        %331 = vmatpush.msra.mxu0 0.0
        %332 = vmatpush.msra.mxu0 0.0
        %333 = vmatpush.msra.mxu0 0.0
        %334 = vmatpush.msra.mxu0 %v283
        %335 = vmatmul.f32.gmra.mxu0 %v291
        %v336 = vpop.f32.mrf.mxu0
        %v337 = vadd.f32 0.0, %v336
        %338 = vmatmul.f32.gmra.mxu0 %v294
        %v339 = vpop.f32.mrf.mxu0
        %v340 = vadd.f32 0.0, %v339
        %341 = vdwg.mxu0
        %342 = vmatpush.msra.mxu0 0.0
        %343 = vmatpush.msra.mxu0 0.0
        %344 = vmatpush.msra.mxu0 0.0
        %345 = vmatpush.msra.mxu0 0.0
        %346 = vmatpush.msra.mxu0 0.0
        %347 = vmatpush.msra.mxu0 0.0
        %348 = vmatpush.msra.mxu0 0.0
        %349 = vmatpush.msra.mxu0 0.0
        %350 = vmatpush.msra.mxu0 0.0
        %351 = vmatpush.msra.mxu0 0.0
        %352 = vmatpush.msra.mxu0 0.0
        %353 = vmatpush.msra.mxu0 0.0
        %354 = vmatpush.msra.mxu0 0.0
        %355 = vmatpush.msra.mxu0 0.0
        %356 = vmatpush.msra.mxu0 0.0
        %357 = vmatpush.msra.mxu0 %v284
        %358 = vmatmul.f32.gmra.mxu0 %v291
        %v359 = vpop.f32.mrf.mxu0
        %v360 = vadd.f32 0.0, %v359
        %361 = vmatmul.f32.gmra.mxu0 %v294
        %v362 = vpop.f32.mrf.mxu0
        %v363 = vadd.f32 0.0, %v362
        %364 = vdwg.mxu0
        %365 = vmatpush.msra.mxu0 0.0
        %366 = vmatpush.msra.mxu0 0.0
        %367 = vmatpush.msra.mxu0 0.0
        %368 = vmatpush.msra.mxu0 0.0
        %369 = vmatpush.msra.mxu0 0.0
        %370 = vmatpush.msra.mxu0 0.0
        %371 = vmatpush.msra.mxu0 0.0
        %372 = vmatpush.msra.mxu0 0.0
        %373 = vmatpush.msra.mxu0 0.0
        %374 = vmatpush.msra.mxu0 0.0
        %375 = vmatpush.msra.mxu0 0.0
        %376 = vmatpush.msra.mxu0 0.0
        %377 = vmatpush.msra.mxu0 0.0
        %378 = vmatpush.msra.mxu0 0.0
        %379 = vmatpush.msra.mxu0 0.0
        %380 = vmatpush.msra.mxu0 %v285
        %381 = vmatmul.f32.gmra.mxu0 %v291
        %v382 = vpop.f32.mrf.mxu0
        %v383 = vadd.f32 0.0, %v382
        %384 = vmatmul.f32.gmra.mxu0 %v294
        %v385 = vpop.f32.mrf.mxu0
        %v386 = vadd.f32 0.0, %v385
        %387 = vdwg.mxu0
        %388 = vmatpush.msra.mxu0 0.0
        %389 = vmatpush.msra.mxu0 0.0
        %390 = vmatpush.msra.mxu0 0.0
        %391 = vmatpush.msra.mxu0 0.0
        %392 = vmatpush.msra.mxu0 0.0
        %393 = vmatpush.msra.mxu0 0.0
        %394 = vmatpush.msra.mxu0 0.0
        %395 = vmatpush.msra.mxu0 0.0
        %396 = vmatpush.msra.mxu0 0.0
        %397 = vmatpush.msra.mxu0 0.0
        %398 = vmatpush.msra.mxu0 0.0
        %399 = vmatpush.msra.mxu0 0.0
        %400 = vmatpush.msra.mxu0 0.0
        %401 = vmatpush.msra.mxu0 0.0
        %402 = vmatpush.msra.mxu0 0.0
        %403 = vmatpush.msra.mxu0 %v286
        %404 = vmatmul.f32.gmra.mxu0 %v291
        %v405 = vpop.f32.mrf.mxu0
        %v406 = vadd.f32 0.0, %v405
        %407 = vmatmul.f32.gmra.mxu0 %v294
        %v408 = vpop.f32.mrf.mxu0
        %v409 = vadd.f32 0.0, %v408
        %410 = vdwg.mxu0
        %411 = vmatpush.msra.mxu0 0.0
        %412 = vmatpush.msra.mxu0 0.0
        %413 = vmatpush.msra.mxu0 0.0
        %414 = vmatpush.msra.mxu0 0.0
        %415 = vmatpush.msra.mxu0 0.0
        %416 = vmatpush.msra.mxu0 0.0
        %417 = vmatpush.msra.mxu0 0.0
        %418 = vmatpush.msra.mxu0 0.0
        %419 = vmatpush.msra.mxu0 0.0
        %420 = vmatpush.msra.mxu0 0.0
        %421 = vmatpush.msra.mxu0 0.0
        %422 = vmatpush.msra.mxu0 0.0
        %423 = vmatpush.msra.mxu0 0.0
        %424 = vmatpush.msra.mxu0 0.0
        %425 = vmatpush.msra.mxu0 0.0
        %426 = vmatpush.msra.mxu0 %v287
        %427 = vmatmul.f32.gmra.mxu0 %v291
        %v428 = vpop.f32.mrf.mxu0
        %v429 = vadd.f32 0.0, %v428
        %430 = vmatmul.f32.gmra.mxu0 %v294
        %v431 = vpop.f32.mrf.mxu0
        %v432 = vadd.f32 0.0, %v431
        %433 = vdwg.mxu0
        %434 = vmatpush.msra.mxu0 0.0
        %435 = vmatpush.msra.mxu0 0.0
        %436 = vmatpush.msra.mxu0 0.0
        %437 = vmatpush.msra.mxu0 0.0
        %438 = vmatpush.msra.mxu0 0.0
        %439 = vmatpush.msra.mxu0 0.0
        %440 = vmatpush.msra.mxu0 0.0
        %441 = vmatpush.msra.mxu0 0.0
        %442 = vmatpush.msra.mxu0 0.0
        %443 = vmatpush.msra.mxu0 0.0
        %444 = vmatpush.msra.mxu0 0.0
        %445 = vmatpush.msra.mxu0 0.0
        %446 = vmatpush.msra.mxu0 0.0
        %447 = vmatpush.msra.mxu0 0.0
        %448 = vmatpush.msra.mxu0 0.0
        %449 = vmatpush.msra.mxu0 %v288
        %450 = vmatmul.f32.gmra.mxu0 %v291
        %v451 = vpop.f32.mrf.mxu0
        %v452 = vadd.f32 0.0, %v451
        %453 = vmatmul.f32.gmra.mxu0 %v294
        %v454 = vpop.f32.mrf.mxu0
        %v455 = vadd.f32 0.0, %v454
        %456 = vdwg.mxu0
        %457 = vst [vmem:[%s246] sm:$0xff] %v314
        %458 = vst [vmem:[%s246 + $0x8] sm:$0xff] %v337
        %459 = vst [vmem:[%s246 + $0x10] sm:$0xff] %v360
        %460 = vst [vmem:[%s246 + $0x18] sm:$0xff] %v383
        %461 = vst [vmem:[%s246 + $0x20] sm:$0xff] %v406
        %462 = vst [vmem:[%s246 + $0x28] sm:$0xff] %v429
        %vm463 = vcmask 261120
        %464 = vst.msk [vmem:[%s246 + $0x30] sm:$0xff] %vm463, %v452
        %465 = vst [vmem:[%s246 + $0x38] sm:$0xff] %v317
        %466 = vst [vmem:[%s246 + $0x40] sm:$0xff] %v340
        %467 = vst [vmem:[%s246 + $0x48] sm:$0xff] %v363
        %468 = vst [vmem:[%s246 + $0x50] sm:$0xff] %v386
        %469 = vst [vmem:[%s246 + $0x58] sm:$0xff] %v409
        %470 = vst [vmem:[%s246 + $0x60] sm:$0xff] %v432
        %471 = vst.msk [vmem:[%s246 + $0x68] sm:$0xff] %vm463, %v455
        %v472 = vld [vmem:[%s2] sm:$0xff]
        %v473 = vld [vmem:[%s2 + $0x8] sm:$0xff]
        %v474 = vld [vmem:[%s2 + $0x10] sm:$0xff]
        %v475 = vld [vmem:[%s2 + $0x18] sm:$0xff]
        %v476 = vld [vmem:[%s2 + $0x20] sm:$0xff]
        %v477 = vld [vmem:[%s2 + $0x28] sm:$0xff]
        %v478 = vld [vmem:[%s2 + $0x30] sm:$0xff]
        %v479 = vld [vmem:[%s2 + $0x38] sm:$0xff]
        %v480 = vld [vmem:[%s2 + $0x40] sm:$0xff]
        %v481 = vld [vmem:[%s2 + $0x48] sm:$0xff]
        %v482 = vld [vmem:[%s2 + $0x50] sm:$0xff]
        %v483 = vld [vmem:[%s2 + $0x58] sm:$0xff]
        %v484 = vld [vmem:[%s2 + $0x60] sm:$0xff]
        %v485 = vld [vmem:[%s2 + $0x68] sm:$0xff]
        %v486 = vld [vmem:[%s2 + $0x70] sm:$0xff]
        %v487 = vld [vmem:[%s2 + $0x78] sm:$0xff]
        %v488 = vld [vmem:[%s2 + $0x80] sm:$0xff]
        %v489 = vld [vmem:[%s2 + $0x88] sm:$0xff]
        %v490 = vld [vmem:[%s2 + $0x90] sm:$0xff]
        %v491 = vld [vmem:[%s2 + $0x98] sm:$0xff]
        %v492 = vld [vmem:[%s2 + $0xa0] sm:$0xff]
        %v493 = vld [vmem:[%s2 + $0xa8] sm:$0xff]
        %v494 = vld [vmem:[%s2 + $0xb0] sm:$0xff]
        %v495 = vld [vmem:[%s2 + $0xb8] sm:$0xff]
        %v496 = vld [vmem:[%s2 + $0xc0] sm:$0xff]
        %v497 = vld [vmem:[%s2 + $0xc8] sm:$0xff]
        %v498 = vld [vmem:[%s2 + $0xd0] sm:$0xff]
        %v499 = vld [vmem:[%s2 + $0xd8] sm:$0xff]
        %v500 = vld [vmem:[%s2 + $0xe0] sm:$0xff]
        %v501 = vld [vmem:[%s2 + $0xe8] sm:$0xff]
        %v502 = vld [vmem:[%s2 + $0xf0] sm:$0xff]
        %v503 = vld [vmem:[%s2 + $0xf8] sm:$0xff]
        %v504 = vld [vmem:[%s2 + $0x100] sm:$0xff]
        %v505 = vld [vmem:[%s2 + $0x108] sm:$0xff]
        %v506 = vld [vmem:[%s2 + $0x110] sm:$0xff]
        %v507 = vld [vmem:[%s2 + $0x118] sm:$0xff]
        %v508 = vld [vmem:[%s2 + $0x120] sm:$0xff]
        %v509 = vld [vmem:[%s2 + $0x128] sm:$0xff]
        %v510 = vld [vmem:[%s2 + $0x130] sm:$0xff]
        %v511 = vld [vmem:[%s2 + $0x138] sm:$0xff]
        %v512 = vld [vmem:[%s2 + $0x140] sm:$0xff]
        %v513 = vld [vmem:[%s2 + $0x148] sm:$0xff]
        %v514 = vld [vmem:[%s2 + $0x150] sm:$0xff]
        %v515 = vld [vmem:[%s2 + $0x158] sm:$0xff]
        %v516 = vld [vmem:[%s2 + $0x160] sm:$0xff]
        %v517 = vld [vmem:[%s2 + $0x168] sm:$0xff]
        %v518 = vld [vmem:[%s2 + $0x170] sm:$0xff]
        %v519 = vld [vmem:[%s2 + $0x178] sm:$0xff]
        %v520 = vld [vmem:[%s2 + $0x180] sm:$0xff]
        %v521 = vld [vmem:[%s2 + $0x188] sm:$0xff]
        %v522 = vld [vmem:[%s2 + $0x190] sm:$0xff]
        %v523 = vld [vmem:[%s2 + $0x198] sm:$0xff]
        %v524 = vld [vmem:[%s2 + $0x1a0] sm:$0xff]
        %v525 = vld [vmem:[%s2 + $0x1a8] sm:$0xff]
        %v526 = vld [vmem:[%s2 + $0x1b0] sm:$0xff]
        %v527 = vld [vmem:[%s2 + $0x1b8] sm:$0xff]
        %v528 = vld [vmem:[%s2 + $0x1c0] sm:$0xff]
        %v529 = vld [vmem:[%s2 + $0x1c8] sm:$0xff]
        %v530 = vld [vmem:[%s2 + $0x1d0] sm:$0xff]
        %v531 = vld [vmem:[%s2 + $0x1d8] sm:$0xff]
        %v532 = vld [vmem:[%s2 + $0x1e0] sm:$0xff]
        %v533 = vld [vmem:[%s2 + $0x1e8] sm:$0xff]
        %v534 = vld [vmem:[%s2 + $0x1f0] sm:$0xff]
        %v535 = vld [vmem:[%s2 + $0x1f8] sm:$0xff]
        %v536 = vld [vmem:[%s2 + $0x200] sm:$0xff]
        %v537 = vld [vmem:[%s2 + $0x208] sm:$0xff]
        %v538 = vld [vmem:[%s2 + $0x210] sm:$0xff]
        %v539 = vld [vmem:[%s2 + $0x218] sm:$0xff]
        %v540 = vld [vmem:[%s2 + $0x220] sm:$0xff]
        %v541 = vld [vmem:[%s2 + $0x228] sm:$0xff]
        %v542 = vld [vmem:[%s2 + $0x230] sm:$0xff]
        %v543 = vld [vmem:[%s2 + $0x238] sm:$0xff]
        %v544 = vld [vmem:[%s2 + $0x240] sm:$0xff]
        %v545 = vld [vmem:[%s2 + $0x248] sm:$0xff]
        %v546 = vld [vmem:[%s2 + $0x250] sm:$0xff]
        %v547 = vld [vmem:[%s2 + $0x258] sm:$0xff]
        %v548 = vld [vmem:[%s2 + $0x260] sm:$0xff]
        %v549 = vld [vmem:[%s2 + $0x268] sm:$0xff]
        %v550 = vld [vmem:[%s2 + $0x270] sm:$0xff]
        %v551 = vld [vmem:[%s2 + $0x278] sm:$0xff]
        %v552 = vld [vmem:[%s2 + $0x280] sm:$0xff]
        %v553 = vld [vmem:[%s2 + $0x288] sm:$0xff]
        %v554 = vld [vmem:[%s2 + $0x290] sm:$0xff]
        %v555 = vld [vmem:[%s2 + $0x298] sm:$0xff]
        %v556 = vld [vmem:[%s2 + $0x2a0] sm:$0xff]
        %v557 = vld [vmem:[%s2 + $0x2a8] sm:$0xff]
        %v558 = vld [vmem:[%s2 + $0x2b0] sm:$0xff]
        %v559 = vld [vmem:[%s2 + $0x2b8] sm:$0xff]
        %v560 = vld [vmem:[%s2 + $0x2c0] sm:$0xff]
        %v561 = vld [vmem:[%s2 + $0x2c8] sm:$0xff]
        %v562 = vld [vmem:[%s2 + $0x2d0] sm:$0xff]
        %v563 = vld [vmem:[%s2 + $0x2d8] sm:$0xff]
        %v564 = vld [vmem:[%s2 + $0x2e0] sm:$0xff]
        %v565 = vld [vmem:[%s2 + $0x2e8] sm:$0xff]
        %v566 = vld [vmem:[%s2 + $0x2f0] sm:$0xff]
        %v567 = vld [vmem:[%s2 + $0x2f8] sm:$0xff]
        %v568 = vld [vmem:[%s2 + $0x300] sm:$0xff]
        %v569 = vld [vmem:[%s2 + $0x308] sm:$0xff]
        %v570 = vld [vmem:[%s2 + $0x310] sm:$0xff]
        %v571 = vld [vmem:[%s2 + $0x318] sm:$0xff]
        %v573 = vsel %vm463, %v452, 0
        %v576 = vsel %vm463, %v455, 0
        %578 = vmatpush.msra.mxu0 %v487
        %579 = vmatpush.msra.mxu0 %v486
        %580 = vmatpush.msra.mxu0 %v485
        %581 = vmatpush.msra.mxu0 %v484
        %582 = vmatpush.msra.mxu0 %v483
        %583 = vmatpush.msra.mxu0 %v482
        %584 = vmatpush.msra.mxu0 %v481
        %585 = vmatpush.msra.mxu0 %v480
        %586 = vmatpush.msra.mxu0 %v479
        %587 = vmatpush.msra.mxu0 %v478
        %588 = vmatpush.msra.mxu0 %v477
        %589 = vmatpush.msra.mxu0 %v476
        %590 = vmatpush.msra.mxu0 %v475
        %591 = vmatpush.msra.mxu0 %v474
        %592 = vmatpush.msra.mxu0 %v473
        %593 = vmatpush.msra.mxu0 %v472
        %594 = vmatmul.f32.gmra.mxu0 %v314
        %v595 = vpop.f32.mrf.mxu0
        %v596 = vadd.f32 0.0, %v595
        %597 = vmatmul.f32.gmra.mxu0 %v317
        %v598 = vpop.f32.mrf.mxu0
        %v599 = vadd.f32 0.0, %v598
        %600 = vdwg.mxu0
        %601 = vmatpush.msra.mxu0 %v503
        %602 = vmatpush.msra.mxu0 %v502
        %603 = vmatpush.msra.mxu0 %v501
        %604 = vmatpush.msra.mxu0 %v500
        %605 = vmatpush.msra.mxu0 %v499
        %606 = vmatpush.msra.mxu0 %v498
        %607 = vmatpush.msra.mxu0 %v497
        %608 = vmatpush.msra.mxu0 %v496
        %609 = vmatpush.msra.mxu0 %v495
        %610 = vmatpush.msra.mxu0 %v494
        %611 = vmatpush.msra.mxu0 %v493
        %612 = vmatpush.msra.mxu0 %v492
        %613 = vmatpush.msra.mxu0 %v491
        %614 = vmatpush.msra.mxu0 %v490
        %615 = vmatpush.msra.mxu0 %v489
        %616 = vmatpush.msra.mxu0 %v488
        %617 = vmatmul.f32.gmra.mxu0 %v337
        %v618 = vpop.f32.mrf.mxu0
        %v619 = vadd.f32 %v596, %v618
        %620 = vmatmul.f32.gmra.mxu0 %v340
        %v621 = vpop.f32.mrf.mxu0
        %v622 = vadd.f32 %v599, %v621
        %623 = vdwg.mxu0
        %624 = vmatpush.msra.mxu0 %v519
        %625 = vmatpush.msra.mxu0 %v518
        %626 = vmatpush.msra.mxu0 %v517
        %627 = vmatpush.msra.mxu0 %v516
        %628 = vmatpush.msra.mxu0 %v515
        %629 = vmatpush.msra.mxu0 %v514
        %630 = vmatpush.msra.mxu0 %v513
        %631 = vmatpush.msra.mxu0 %v512
        %632 = vmatpush.msra.mxu0 %v511
        %633 = vmatpush.msra.mxu0 %v510
        %634 = vmatpush.msra.mxu0 %v509
        %635 = vmatpush.msra.mxu0 %v508
        %636 = vmatpush.msra.mxu0 %v507
        %637 = vmatpush.msra.mxu0 %v506
        %638 = vmatpush.msra.mxu0 %v505
        %639 = vmatpush.msra.mxu0 %v504
        %640 = vmatmul.f32.gmra.mxu0 %v360
        %v641 = vpop.f32.mrf.mxu0
        %v642 = vadd.f32 %v619, %v641
        %643 = vmatmul.f32.gmra.mxu0 %v363
        %v644 = vpop.f32.mrf.mxu0
        %v645 = vadd.f32 %v622, %v644
        %646 = vdwg.mxu0
        %647 = vmatpush.msra.mxu0 %v535
        %648 = vmatpush.msra.mxu0 %v534
        %649 = vmatpush.msra.mxu0 %v533
        %650 = vmatpush.msra.mxu0 %v532
        %651 = vmatpush.msra.mxu0 %v531
        %652 = vmatpush.msra.mxu0 %v530
        %653 = vmatpush.msra.mxu0 %v529
        %654 = vmatpush.msra.mxu0 %v528
        %655 = vmatpush.msra.mxu0 %v527
        %656 = vmatpush.msra.mxu0 %v526
        %657 = vmatpush.msra.mxu0 %v525
        %658 = vmatpush.msra.mxu0 %v524
        %659 = vmatpush.msra.mxu0 %v523
        %660 = vmatpush.msra.mxu0 %v522
        %661 = vmatpush.msra.mxu0 %v521
        %662 = vmatpush.msra.mxu0 %v520
        %663 = vmatmul.f32.gmra.mxu0 %v383
        %v664 = vpop.f32.mrf.mxu0
        %v665 = vadd.f32 %v642, %v664
        %666 = vmatmul.f32.gmra.mxu0 %v386
        %v667 = vpop.f32.mrf.mxu0
        %v668 = vadd.f32 %v645, %v667
        %669 = vdwg.mxu0
        %670 = vmatpush.msra.mxu0 %v551
        %671 = vmatpush.msra.mxu0 %v550
        %672 = vmatpush.msra.mxu0 %v549
        %673 = vmatpush.msra.mxu0 %v548
        %674 = vmatpush.msra.mxu0 %v547
        %675 = vmatpush.msra.mxu0 %v546
        %676 = vmatpush.msra.mxu0 %v545
        %677 = vmatpush.msra.mxu0 %v544
        %678 = vmatpush.msra.mxu0 %v543
        %679 = vmatpush.msra.mxu0 %v542
        %680 = vmatpush.msra.mxu0 %v541
        %681 = vmatpush.msra.mxu0 %v540
        %682 = vmatpush.msra.mxu0 %v539
        %683 = vmatpush.msra.mxu0 %v538
        %684 = vmatpush.msra.mxu0 %v537
        %685 = vmatpush.msra.mxu0 %v536
        %686 = vmatmul.f32.gmra.mxu0 %v406
        %v687 = vpop.f32.mrf.mxu0
        %v688 = vadd.f32 %v665, %v687
        %689 = vmatmul.f32.gmra.mxu0 %v409
        %v690 = vpop.f32.mrf.mxu0
        %v691 = vadd.f32 %v668, %v690
        %692 = vdwg.mxu0
        %693 = vmatpush.msra.mxu0 %v567
        %694 = vmatpush.msra.mxu0 %v566
        %695 = vmatpush.msra.mxu0 %v565
        %696 = vmatpush.msra.mxu0 %v564
        %697 = vmatpush.msra.mxu0 %v563
        %698 = vmatpush.msra.mxu0 %v562
        %699 = vmatpush.msra.mxu0 %v561
        %700 = vmatpush.msra.mxu0 %v560
        %701 = vmatpush.msra.mxu0 %v559
        %702 = vmatpush.msra.mxu0 %v558
        %703 = vmatpush.msra.mxu0 %v557
        %704 = vmatpush.msra.mxu0 %v556
        %705 = vmatpush.msra.mxu0 %v555
        %706 = vmatpush.msra.mxu0 %v554
        %707 = vmatpush.msra.mxu0 %v553
        %708 = vmatpush.msra.mxu0 %v552
        %709 = vmatmul.f32.gmra.mxu0 %v429
        %v710 = vpop.f32.mrf.mxu0
        %v711 = vadd.f32 %v688, %v710
        %712 = vmatmul.f32.gmra.mxu0 %v432
        %v713 = vpop.f32.mrf.mxu0
        %v714 = vadd.f32 %v691, %v713
        %715 = vdwg.mxu0
        %716 = vmatpush.msra.mxu0 0.0
        %717 = vmatpush.msra.mxu0 0.0
        %718 = vmatpush.msra.mxu0 0.0
        %719 = vmatpush.msra.mxu0 0.0
        %720 = vmatpush.msra.mxu0 0.0
        %721 = vmatpush.msra.mxu0 0.0
        %722 = vmatpush.msra.mxu0 0.0
        %723 = vmatpush.msra.mxu0 0.0
        %724 = vmatpush.msra.mxu0 0.0
        %725 = vmatpush.msra.mxu0 0.0
        %726 = vmatpush.msra.mxu0 0.0
        %727 = vmatpush.msra.mxu0 0.0
        %728 = vmatpush.msra.mxu0 %v571
        %729 = vmatpush.msra.mxu0 %v570
        %730 = vmatpush.msra.mxu0 %v569
        %731 = vmatpush.msra.mxu0 %v568
        %732 = vmatmul.f32.gmra.mxu0 %v573
        %v733 = vpop.f32.mrf.mxu0
        %v734 = vadd.f32 %v711, %v733
        %735 = vmatmul.f32.gmra.mxu0 %v576
        %v736 = vpop.f32.mrf.mxu0
        %v737 = vadd.f32 %v714, %v736
        %738 = vdwg.mxu0
        %vm739 = vcmask 130048
        %740 = vst.msk [vmem:[%s272] sm:$0xff] %vm739, %v734
        %741 = vst.msk [vmem:[%s272 + $0x8] sm:$0xff] %vm739, %v737
        %v742 = vld [vmem:[%s3] sm:$0xff]
        %v743 = vld [vmem:[%s3 + $0x8] sm:$0xff]
        %v744 = vld [vmem:[%s3 + $0x10] sm:$0xff]
        %v745 = vld [vmem:[%s3 + $0x18] sm:$0xff]
        %v746 = vld [vmem:[%s3 + $0x20] sm:$0xff]
        %v747 = vld [vmem:[%s3 + $0x28] sm:$0xff]
        %v748 = vld [vmem:[%s3 + $0x30] sm:$0xff]
        %v749 = vld [vmem:[%s3 + $0x38] sm:$0xff]
        %v750 = vld [vmem:[%s3 + $0x40] sm:$0xff]
        %v751 = vld [vmem:[%s3 + $0x48] sm:$0xff]
        %v752 = vld [vmem:[%s3 + $0x50] sm:$0xff]
        %v753 = vld [vmem:[%s3 + $0x58] sm:$0xff]
        %v754 = vld [vmem:[%s3 + $0x60] sm:$0xff]
        %v755 = vld [vmem:[%s3 + $0x68] sm:$0xff]
        %v756 = vld [vmem:[%s3 + $0x70] sm:$0xff]
        %v757 = vld [vmem:[%s3 + $0x78] sm:$0xff]
        %v758 = vld [vmem:[%s3 + $0x80] sm:$0xff]
        %v759 = vld [vmem:[%s3 + $0x88] sm:$0xff]
        %v760 = vld [vmem:[%s3 + $0x90] sm:$0xff]
        %v761 = vld [vmem:[%s3 + $0x98] sm:$0xff]
        %v762 = vld [vmem:[%s3 + $0xa0] sm:$0xff]
        %v763 = vld [vmem:[%s3 + $0xa8] sm:$0xff]
        %v764 = vld [vmem:[%s3 + $0xb0] sm:$0xff]
        %v765 = vld [vmem:[%s3 + $0xb8] sm:$0xff]
        %v766 = vld [vmem:[%s3 + $0xc0] sm:$0xff]
        %v767 = vld [vmem:[%s3 + $0xc8] sm:$0xff]
        %v768 = vld [vmem:[%s3 + $0xd0] sm:$0xff]
        %v769 = vld [vmem:[%s3 + $0xd8] sm:$0xff]
        %v770 = vld [vmem:[%s3 + $0xe0] sm:$0xff]
        %v771 = vld [vmem:[%s3 + $0xe8] sm:$0xff]
        %v772 = vld [vmem:[%s3 + $0xf0] sm:$0xff]
        %v773 = vld [vmem:[%s3 + $0xf8] sm:$0xff]
        %v774 = vld [vmem:[%s3 + $0x100] sm:$0xff]
        %v775 = vld [vmem:[%s3 + $0x108] sm:$0xff]
        %v776 = vld [vmem:[%s3 + $0x110] sm:$0xff]
        %v777 = vld [vmem:[%s3 + $0x118] sm:$0xff]
        %v778 = vld [vmem:[%s3 + $0x120] sm:$0xff]
        %v779 = vld [vmem:[%s3 + $0x128] sm:$0xff]
        %v780 = vld [vmem:[%s3 + $0x130] sm:$0xff]
        %v781 = vld [vmem:[%s3 + $0x138] sm:$0xff]
        %v782 = vld [vmem:[%s3 + $0x140] sm:$0xff]
        %v783 = vld [vmem:[%s3 + $0x148] sm:$0xff]
        %v784 = vld [vmem:[%s3 + $0x150] sm:$0xff]
        %v785 = vld [vmem:[%s3 + $0x158] sm:$0xff]
        %v786 = vld [vmem:[%s3 + $0x160] sm:$0xff]
        %v787 = vld [vmem:[%s3 + $0x168] sm:$0xff]
        %v788 = vld [vmem:[%s3 + $0x170] sm:$0xff]
        %v789 = vld [vmem:[%s3 + $0x178] sm:$0xff]
        %v790 = vld [vmem:[%s3 + $0x180] sm:$0xff]
        %v791 = vld [vmem:[%s3 + $0x188] sm:$0xff]
        %v792 = vld [vmem:[%s3 + $0x190] sm:$0xff]
        %v793 = vld [vmem:[%s3 + $0x198] sm:$0xff]
        %v794 = vld [vmem:[%s3 + $0x1a0] sm:$0xff]
        %v795 = vld [vmem:[%s3 + $0x1a8] sm:$0xff]
        %v796 = vld [vmem:[%s3 + $0x1b0] sm:$0xff]
        %v797 = vld [vmem:[%s3 + $0x1b8] sm:$0xff]
        %v798 = vld [vmem:[%s3 + $0x1c0] sm:$0xff]
        %v799 = vld [vmem:[%s3 + $0x1c8] sm:$0xff]
        %v800 = vld [vmem:[%s3 + $0x1d0] sm:$0xff]
        %v801 = vld [vmem:[%s3 + $0x1d8] sm:$0xff]
        %v802 = vld [vmem:[%s3 + $0x1e0] sm:$0xff]
        %v803 = vld [vmem:[%s3 + $0x1e8] sm:$0xff]
        %v804 = vld [vmem:[%s3 + $0x1f0] sm:$0xff]
        %v805 = vld [vmem:[%s3 + $0x1f8] sm:$0xff]
        %v806 = vld [vmem:[%s3 + $0x200] sm:$0xff]
        %v807 = vld [vmem:[%s3 + $0x208] sm:$0xff]
        %v808 = vld [vmem:[%s3 + $0x210] sm:$0xff]
        %v809 = vld [vmem:[%s3 + $0x218] sm:$0xff]
        %v810 = vld [vmem:[%s3 + $0x220] sm:$0xff]
        %v811 = vld [vmem:[%s3 + $0x228] sm:$0xff]
        %v812 = vld [vmem:[%s3 + $0x230] sm:$0xff]
        %v813 = vld [vmem:[%s3 + $0x238] sm:$0xff]
        %v814 = vld [vmem:[%s3 + $0x240] sm:$0xff]
        %v815 = vld [vmem:[%s3 + $0x248] sm:$0xff]
        %v816 = vld [vmem:[%s3 + $0x250] sm:$0xff]
        %v817 = vld [vmem:[%s3 + $0x258] sm:$0xff]
        %v818 = vld [vmem:[%s3 + $0x260] sm:$0xff]
        %v819 = vld [vmem:[%s3 + $0x268] sm:$0xff]
        %v820 = vld [vmem:[%s3 + $0x270] sm:$0xff]
        %v821 = vld [vmem:[%s3 + $0x278] sm:$0xff]
        %v822 = vld [vmem:[%s3 + $0x280] sm:$0xff]
        %v823 = vld [vmem:[%s3 + $0x288] sm:$0xff]
        %v824 = vld [vmem:[%s3 + $0x290] sm:$0xff]
        %v825 = vld [vmem:[%s3 + $0x298] sm:$0xff]
        %v826 = vld [vmem:[%s3 + $0x2a0] sm:$0xff]
        %v827 = vld [vmem:[%s3 + $0x2a8] sm:$0xff]
        %v828 = vld [vmem:[%s3 + $0x2b0] sm:$0xff]
        %v829 = vld [vmem:[%s3 + $0x2b8] sm:$0xff]
        %v830 = vld [vmem:[%s3 + $0x2c0] sm:$0xff]
        %v831 = vld [vmem:[%s3 + $0x2c8] sm:$0xff]
        %v832 = vld [vmem:[%s3 + $0x2d0] sm:$0xff]
        %v833 = vld [vmem:[%s3 + $0x2d8] sm:$0xff]
        %v834 = vld [vmem:[%s3 + $0x2e0] sm:$0xff]
        %v835 = vld [vmem:[%s3 + $0x2e8] sm:$0xff]
        %v836 = vld [vmem:[%s3 + $0x2f0] sm:$0xff]
        %v837 = vld [vmem:[%s3 + $0x2f8] sm:$0xff]
        %v838 = vld [vmem:[%s3 + $0x300] sm:$0xff]
        %v839 = vld [vmem:[%s3 + $0x308] sm:$0xff]
        %v840 = vld [vmem:[%s3 + $0x310] sm:$0xff]
        %v841 = vld [vmem:[%s3 + $0x318] sm:$0xff]
        %842 = vmatpush.msra.mxu0 %v757
        %843 = vmatpush.msra.mxu0 %v756
        %844 = vmatpush.msra.mxu0 %v755
        %845 = vmatpush.msra.mxu0 %v754
        %846 = vmatpush.msra.mxu0 %v753
        %847 = vmatpush.msra.mxu0 %v752
        %848 = vmatpush.msra.mxu0 %v751
        %849 = vmatpush.msra.mxu0 %v750
        %850 = vmatpush.msra.mxu0 %v749
        %851 = vmatpush.msra.mxu0 %v748
        %852 = vmatpush.msra.mxu0 %v747
        %853 = vmatpush.msra.mxu0 %v746
        %854 = vmatpush.msra.mxu0 %v745
        %855 = vmatpush.msra.mxu0 %v744
        %856 = vmatpush.msra.mxu0 %v743
        %857 = vmatpush.msra.mxu0 %v742
        %858 = vmatmul.f32.gmra.mxu0 %v314
        %v859 = vpop.f32.mrf.mxu0
        %v860 = vadd.f32 0.0, %v859
        %861 = vmatmul.f32.gmra.mxu0 %v317
        %v862 = vpop.f32.mrf.mxu0
        %v863 = vadd.f32 0.0, %v862
        %864 = vdwg.mxu0
        %865 = vmatpush.msra.mxu0 %v773
        %866 = vmatpush.msra.mxu0 %v772
        %867 = vmatpush.msra.mxu0 %v771
        %868 = vmatpush.msra.mxu0 %v770
        %869 = vmatpush.msra.mxu0 %v769
        %870 = vmatpush.msra.mxu0 %v768
        %871 = vmatpush.msra.mxu0 %v767
        %872 = vmatpush.msra.mxu0 %v766
        %873 = vmatpush.msra.mxu0 %v765
        %874 = vmatpush.msra.mxu0 %v764
        %875 = vmatpush.msra.mxu0 %v763
        %876 = vmatpush.msra.mxu0 %v762
        %877 = vmatpush.msra.mxu0 %v761
        %878 = vmatpush.msra.mxu0 %v760
        %879 = vmatpush.msra.mxu0 %v759
        %880 = vmatpush.msra.mxu0 %v758
        %881 = vmatmul.f32.gmra.mxu0 %v337
        %v882 = vpop.f32.mrf.mxu0
        %v883 = vadd.f32 %v860, %v882
        %884 = vmatmul.f32.gmra.mxu0 %v340
        %v885 = vpop.f32.mrf.mxu0
        %v886 = vadd.f32 %v863, %v885
        %887 = vdwg.mxu0
        %888 = vmatpush.msra.mxu0 %v789
        %889 = vmatpush.msra.mxu0 %v788
        %890 = vmatpush.msra.mxu0 %v787
        %891 = vmatpush.msra.mxu0 %v786
        %892 = vmatpush.msra.mxu0 %v785
        %893 = vmatpush.msra.mxu0 %v784
        %894 = vmatpush.msra.mxu0 %v783
        %895 = vmatpush.msra.mxu0 %v782
        %896 = vmatpush.msra.mxu0 %v781
        %897 = vmatpush.msra.mxu0 %v780
        %898 = vmatpush.msra.mxu0 %v779
        %899 = vmatpush.msra.mxu0 %v778
        %900 = vmatpush.msra.mxu0 %v777
        %901 = vmatpush.msra.mxu0 %v776
        %902 = vmatpush.msra.mxu0 %v775
        %903 = vmatpush.msra.mxu0 %v774
        %904 = vmatmul.f32.gmra.mxu0 %v360
        %v905 = vpop.f32.mrf.mxu0
        %v906 = vadd.f32 %v883, %v905
        %907 = vmatmul.f32.gmra.mxu0 %v363
        %v908 = vpop.f32.mrf.mxu0
        %v909 = vadd.f32 %v886, %v908
        %910 = vdwg.mxu0
        %911 = vmatpush.msra.mxu0 %v805
        %912 = vmatpush.msra.mxu0 %v804
        %913 = vmatpush.msra.mxu0 %v803
        %914 = vmatpush.msra.mxu0 %v802
        %915 = vmatpush.msra.mxu0 %v801
        %916 = vmatpush.msra.mxu0 %v800
        %917 = vmatpush.msra.mxu0 %v799
        %918 = vmatpush.msra.mxu0 %v798
        %919 = vmatpush.msra.mxu0 %v797
        %920 = vmatpush.msra.mxu0 %v796
        %921 = vmatpush.msra.mxu0 %v795
        %922 = vmatpush.msra.mxu0 %v794
        %923 = vmatpush.msra.mxu0 %v793
        %924 = vmatpush.msra.mxu0 %v792
        %925 = vmatpush.msra.mxu0 %v791
        %926 = vmatpush.msra.mxu0 %v790
        %927 = vmatmul.f32.gmra.mxu0 %v383
        %v928 = vpop.f32.mrf.mxu0
        %v929 = vadd.f32 %v906, %v928
        %930 = vmatmul.f32.gmra.mxu0 %v386
        %v931 = vpop.f32.mrf.mxu0
        %v932 = vadd.f32 %v909, %v931
        %933 = vdwg.mxu0
        %934 = vmatpush.msra.mxu0 %v821
        %935 = vmatpush.msra.mxu0 %v820
        %936 = vmatpush.msra.mxu0 %v819
        %937 = vmatpush.msra.mxu0 %v818
        %938 = vmatpush.msra.mxu0 %v817
        %939 = vmatpush.msra.mxu0 %v816
        %940 = vmatpush.msra.mxu0 %v815
        %941 = vmatpush.msra.mxu0 %v814
        %942 = vmatpush.msra.mxu0 %v813
        %943 = vmatpush.msra.mxu0 %v812
        %944 = vmatpush.msra.mxu0 %v811
        %945 = vmatpush.msra.mxu0 %v810
        %946 = vmatpush.msra.mxu0 %v809
        %947 = vmatpush.msra.mxu0 %v808
        %948 = vmatpush.msra.mxu0 %v807
        %949 = vmatpush.msra.mxu0 %v806
        %950 = vmatmul.f32.gmra.mxu0 %v406
        %v951 = vpop.f32.mrf.mxu0
        %v952 = vadd.f32 %v929, %v951
        %953 = vmatmul.f32.gmra.mxu0 %v409
        %v954 = vpop.f32.mrf.mxu0
        %v955 = vadd.f32 %v932, %v954
        %956 = vdwg.mxu0
        %957 = vmatpush.msra.mxu0 %v837
        %958 = vmatpush.msra.mxu0 %v836
        %959 = vmatpush.msra.mxu0 %v835
        %960 = vmatpush.msra.mxu0 %v834
        %961 = vmatpush.msra.mxu0 %v833
        %962 = vmatpush.msra.mxu0 %v832
        %963 = vmatpush.msra.mxu0 %v831
        %964 = vmatpush.msra.mxu0 %v830
        %965 = vmatpush.msra.mxu0 %v829
        %966 = vmatpush.msra.mxu0 %v828
        %967 = vmatpush.msra.mxu0 %v827
        %968 = vmatpush.msra.mxu0 %v826
        %969 = vmatpush.msra.mxu0 %v825
        %970 = vmatpush.msra.mxu0 %v824
        %971 = vmatpush.msra.mxu0 %v823
        %972 = vmatpush.msra.mxu0 %v822
        %973 = vmatmul.f32.gmra.mxu0 %v429
        %v974 = vpop.f32.mrf.mxu0
        %v975 = vadd.f32 %v952, %v974
        %976 = vmatmul.f32.gmra.mxu0 %v432
        %v977 = vpop.f32.mrf.mxu0
        %v978 = vadd.f32 %v955, %v977
        %979 = vdwg.mxu0
        %980 = vmatpush.msra.mxu0 0.0
        %981 = vmatpush.msra.mxu0 0.0
        %982 = vmatpush.msra.mxu0 0.0
        %983 = vmatpush.msra.mxu0 0.0
        %984 = vmatpush.msra.mxu0 0.0
        %985 = vmatpush.msra.mxu0 0.0
        %986 = vmatpush.msra.mxu0 0.0
        %987 = vmatpush.msra.mxu0 0.0
        %988 = vmatpush.msra.mxu0 0.0
        %989 = vmatpush.msra.mxu0 0.0
        %990 = vmatpush.msra.mxu0 0.0
        %991 = vmatpush.msra.mxu0 0.0
        %992 = vmatpush.msra.mxu0 %v841
        %993 = vmatpush.msra.mxu0 %v840
        %994 = vmatpush.msra.mxu0 %v839
        %995 = vmatpush.msra.mxu0 %v838
        %996 = vmatmul.f32.gmra.mxu0 %v573
        %v997 = vpop.f32.mrf.mxu0
        %v998 = vadd.f32 %v975, %v997
        %999 = vmatmul.f32.gmra.mxu0 %v576
        %v1000 = vpop.f32.mrf.mxu0
        %v1001 = vadd.f32 %v978, %v1000
        %1002 = vdwg.mxu0
        %1003 = vst.msk [vmem:[%s278] sm:$0xff] %vm739, %v998
        %1004 = vst.msk [vmem:[%s278 + $0x8] sm:$0xff] %vm739, %v1001
        %s1005 = sand.u32 %s118, 1
        %s1006 = scalar_lea.sflag [#allocation3], %s1005
        %s1007 = sand.u32 %s118, 1
        %s1008 = smul.addr %s1007, 112
        %s1009 = scalar_lea.vmem [#allocation2], %s1008
        %s1010 = smul.u32 2, %s21
        %p1011 = scmp.lt.s32.totalorder %s1010, 3
        %s1012 = scalar_select %p1011, %s1010, 3
        %s1013 = smul.addr %s1012, 8
        %s1014 = scalar_lea.vmem %s5, %s1013
        %s1015 = smul.u32 2, %s21
        %p1016 = scmp.lt.s32.totalorder %s1015, 3
        %s1017 = scalar_select %p1016, %s1015, 3
        %s1018 = smul.addr %s1017, 8
        %s1019 = scalar_lea.vmem %s6, %s1018
        // Predicated region
        $region37: #{tpu_custom_call.1} parent=35 // pred_check
          %p1020 = pneg %p128
        $region38: #{tpu_custom_call.1} parent=35 // pred_check_branch
          %1022 = sbr.rel (%p1020) target = $region40
        $region39: #{tpu_custom_call.1} parent=35 // pred_region
          %s1023 = smul.u32 2, %s21
          %1025 = vsyncadd %s1006, 0
          %s1026 = smul.addr %s1023, 7
          %s1027 = smul.addr %s1026, 8
          %s1028 = scalar_lea.hbm %s4, %s1027
          %s1029 = sshll.u32 %s1009, 4
          %s1030 = int_to_ptr.vmem [resolvable:$true] %s1029
          %s1031 = sshll.u32 %s1028, 4
          %s1032 = int_to_ptr.hbm [resolvable:$true] %s1031
          %1037 = dma.vmem_to_hbm [thread:$0]  %s1030, 1792, %s1032, %s1006, 896, 896, 56
        $region40: #{tpu_custom_call.1} parent=35 // pred_fallthru
          _
        // Predicated region
        $region41: #{tpu_custom_call.1} parent=35 // pred_check
          %p1038 = pneg %p154
        $region42: #{tpu_custom_call.1} parent=35 // pred_check_branch
          %1040 = sbr.rel (%p1038) target = $region44
        $region43: #{tpu_custom_call.1} parent=35 // pred_region
          %s1041 = smul.u32 2, %s21
        $region44: #{tpu_custom_call.1} parent=35 // pred_fallthru
          _
        // Predicated region
        $region45: #{tpu_custom_call.1} parent=35 // pred_check
          %p1042 = pneg %p180
        $region46: #{tpu_custom_call.1} parent=35 // pred_check_branch
          %1044 = sbr.rel (%p1042) target = $region48
        $region47: #{tpu_custom_call.1} parent=35 // pred_region
          %s1045 = smul.u32 2, %s21
        $region48: #{tpu_custom_call.1} parent=35 // pred_fallthru
          _
      $region36: #{tpu_custom_call.1} parent=5 // pred_fallthru
        _
      %p1046 = scmp.le.s32.totalorder 2, %s16
      // Predicated region
      $region49: #{tpu_custom_call.1} parent=5 // pred_check
        %p1047 = pneg %p1046
      $region50: #{tpu_custom_call.1} parent=5 // pred_check_branch
        %1049 = sbr.rel (%p1047) target = $region52
      $region51: #{tpu_custom_call.1} parent=5 // pred_region
        %s1050 = ssub.s32 %s16, 2
        // Predicated region
        $region53: #{tpu_custom_call.1} parent=51 // pred_check
          %p1051 = pneg %p134
        $region54: #{tpu_custom_call.1} parent=51 // pred_check_branch
          %1053 = sbr.rel (%p1051) target = $region56
        $region55: #{tpu_custom_call.1} parent=51 // pred_region
          %s1054 = sand.u32 %s119, 1
          %s1055 = scalar_lea.sflag [#allocation3], %s1054
          %s1056 = sand.u32 %s119, 1
          %s1057 = smul.addr %s1056, 112
          %s1058 = scalar_lea.vmem [#allocation2], %s1057
          %1060 = dma.done %s1055, 1792
        $region56: #{tpu_custom_call.1} parent=51 // pred_fallthru
          _
        // Predicated region
        $region57: #{tpu_custom_call.1} parent=51 // pred_check
          %p1061 = pneg %p160
        $region58: #{tpu_custom_call.1} parent=51 // pred_check_branch
          %1063 = sbr.rel (%p1061) target = $region60
        $region59: #{tpu_custom_call.1} parent=51 // pred_region
          %s1064 = smul.u32 2, %s22
          %p1065 = scmp.lt.s32.totalorder %s1064, 3
          %s1066 = scalar_select %p1065, %s1064, 3
          %s1067 = smul.addr %s1066, 8
          %s1068 = scalar_lea.vmem %s5, %s1067
        $region60: #{tpu_custom_call.1} parent=51 // pred_fallthru
          _
        // Predicated region
        $region61: #{tpu_custom_call.1} parent=51 // pred_check
          %p1069 = pneg %p186
        $region62: #{tpu_custom_call.1} parent=51 // pred_check_branch
          %1071 = sbr.rel (%p1069) target = $region64
        $region63: #{tpu_custom_call.1} parent=51 // pred_region
          %s1072 = smul.u32 2, %s22
          %p1073 = scmp.lt.s32.totalorder %s1072, 3
          %s1074 = scalar_select %p1073, %s1072, 3
          %s1075 = smul.addr %s1074, 8
          %s1076 = scalar_lea.vmem %s6, %s1075
        $region64: #{tpu_custom_call.1} parent=51 // pred_fallthru
          _
      $region52: #{tpu_custom_call.1} parent=5 // pred_fallthru
        _
    $region6: #{tpu_custom_call.1} parent=1 // loop_footer
      %s20 = sadd.s32 1, %s16
    $region7: #{tpu_custom_call.1} parent=1 // loop_footer_branch
      %15 = sbr.rel target = $region3
    $region8: #{tpu_custom_call.1} parent=1 // loop_exit
      _
    %1077 = vsyncpa [#allocation3], 1
    %s1078 = scalar_lea.sflag [#allocation3], 1
    %1079 = vsyncpa %s1078, 1

</llo_original>
